<compile_context>
chip_gen: v7x
topology: tpu7x:2x2x1
jax: 0.10.0
libtpu: 0.0.40
codegen_flags: <defaults>
</compile_context>

<pallas_src>
import functools

import jax
import jax.numpy as jnp
from jax.experimental import pallas as pl
from jax.experimental.pallas import tpu as pltpu


def _round_up(x, m):
    return ((x + m - 1) // m) * m


def _pad2d(x, rows, cols):
    pr, pc = rows - x.shape[0], cols - x.shape[1]
    if pr == 0 and pc == 0:
        return x
    return jnp.pad(x, ((0, pr), (0, pc)))


def _largest_div_tile(dim, max_tile):
    """Largest multiple-of-128 tile <= max_tile that divides `dim` (dim % 128 == 0)."""
    u = dim // 128
    umax = max(1, max_tile // 128)
    for d in range(min(u, umax), 0, -1):
        if u % d == 0:
            return d * 128
    return 128


def _linear_kernel_acc(x_ref, w_ref, b_ref, o_ref, acc_ref, *, apply_relu):
    """(tm, tn) output tile with K as the innermost (reduction) grid axis."""
    k = pl.program_id(2)

    @pl.when(k == 0)
    def _():
        acc_ref[...] = jnp.zeros_like(acc_ref)

    acc_ref[...] += jnp.dot(
        x_ref[...], w_ref[...], preferred_element_type=jnp.float32
    )

    @pl.when(k == pl.num_programs(2) - 1)
    def _():
        y = acc_ref[...] + b_ref[...]          # (1, tn) f32 broadcasts
        if apply_relu:
            y = jnp.maximum(y, 0.0)
        o_ref[...] = y.astype(o_ref.dtype)


def _linear_kernel_noacc(x_ref, w_ref, b_ref, o_ref, *, apply_relu):
    """Single-K-step variant: no f32 scratch, no predication."""
    y = jnp.dot(x_ref[...], w_ref[...], preferred_element_type=jnp.float32)
    y = y + b_ref[...]
    if apply_relu:
        y = jnp.maximum(y, 0.0)
    o_ref[...] = y.astype(o_ref.dtype)


def pallas_linear(x, w, b, *, apply_relu, out_dtype,
                  tm_max=1024, tn_max=512, tk_max=4096):
    """y = relu?(x @ w + b) on the MXU (bf16 operands, f32 accumulation).

    x: (M, K) float.  w: (Kp, Np) bf16, PRE-padded to multiples of 128 at init.
    b: (1, Np) f32, pre-padded.  Returns the full padded (Mp, Np) result; the
    caller slices.  Zero-padding is exact for the matmul chain.
    """
    M, K = x.shape
    Kp, Np = w.shape
    assert K <= Kp and Kp % 128 == 0 and Np % 128 == 0
    assert b.shape == (1, Np)

    compute_dtype = jnp.bfloat16

    # Balanced M tiling (avoids near-2x padding for unlucky batch sizes).
    Mb = _round_up(M, 16)
    nm = -(-Mb // tm_max)
    tm = _round_up(-(-Mb // nm), 16)
    Mp = nm * tm

    # tn / tk divide the pre-padded dims exactly -> no zero weight streaming.
    tn = _largest_div_tile(Np, tn_max)
    tk = _largest_div_tile(Kp, tk_max)
    nn = Np // tn
    nk = Kp // tk

    # Activation-only padding (tiny vs. the weight stream; no-op mid-chain).
    xp = _pad2d(x.astype(compute_dtype), Mp, Kp)

    # VMEM budget from the actual tile plan; cap well below v7x's 64 MiB/TC.
    bytes_in = 2 * (tm * tk * 2 + tk * tn * 2 + tn * 4)
    bytes_out = 2 * tm * tn * jnp.dtype(out_dtype).itemsize
    bytes_acc = tm * tn * 4 if nk > 1 else 0
    vmem_limit = int(1.5 * (bytes_in + bytes_out + bytes_acc)) + (4 << 20)
    vmem_limit = min(max(vmem_limit, 32 << 20), 48 << 20)

    if nk == 1:
        kernel = functools.partial(_linear_kernel_noacc, apply_relu=apply_relu)
        grid_spec = pltpu.PrefetchScalarGridSpec(
            num_scalar_prefetch=0,
            grid=(nm, nn),
            in_specs=[
                pl.BlockSpec((tm, tk), lambda i, j: (i, 0)),
                pl.BlockSpec((tk, tn), lambda i, j: (0, j)),
                pl.BlockSpec((1, tn), lambda i, j: (0, j)),
            ],
            out_specs=pl.BlockSpec((tm, tn), lambda i, j: (i, j)),
            scratch_shapes=[],
        )
        dims = ("parallel", "parallel")
    else:
        kernel = functools.partial(_linear_kernel_acc, apply_relu=apply_relu)
        grid_spec = pltpu.PrefetchScalarGridSpec(
            num_scalar_prefetch=0,
            grid=(nm, nn, nk),
            in_specs=[
                pl.BlockSpec((tm, tk), lambda i, j, k: (i, k)),
                pl.BlockSpec((tk, tn), lambda i, j, k: (k, j)),
                pl.BlockSpec((1, tn), lambda i, j, k: (0, j)),
            ],
            out_specs=pl.BlockSpec((tm, tn), lambda i, j, k: (i, j)),
            scratch_shapes=[pltpu.VMEM((tm, tn), jnp.float32)],
        )
        dims = ("parallel", "parallel", "arbitrary")

    return pl.pallas_call(
        kernel,
        out_shape=jax.ShapeDtypeStruct((Mp, Np), out_dtype),
        grid_spec=grid_spec,
        compiler_params=pltpu.CompilerParams(
            dimension_semantics=dims,
            vmem_limit_bytes=vmem_limit,
        ),
    )(xp, w, b)


def init_params(key, in_channels, classes, mid_channels=4096):
    """Synthetic params with shapes matching VGGOutputBlock.

    Weights stored (in, out); pre-padded to multiples of 128 and pre-cast to
    bf16 ONCE here (not inside the jitted forward).  Biases are (1, Np) f32,
    zero-padded.
    """
    ks = jax.random.split(key, 6)

    def lin(kw, kb, fan_in, fan_out):
        scale = 1.0 / jnp.sqrt(fan_in)
        w = jax.random.uniform(kw, (fan_in, fan_out), jnp.float32, -scale, scale)
        b = jax.random.uniform(kb, (fan_out,), jnp.float32, -scale, scale)
        kp, np_ = _round_up(fan_in, 128), _round_up(fan_out, 128)
        wp = _pad2d(w, kp, np_).astype(jnp.bfloat16)
        bp = _pad2d(b.reshape(1, -1), 1, np_)
        return wp, bp

    w1, b1 = lin(ks[0], ks[1], in_channels, mid_channels)
    w2, b2 = lin(ks[2], ks[3], mid_channels, mid_channels)
    w3, b3 = lin(ks[4], ks[5], mid_channels, classes)
    return dict(w1=w1, b1=b1, w2=w2, b2=b2, w3=w3, b3=b3)


@functools.partial(jax.jit, static_argnames=("classes",))
def vgg_output_block(x, params, *, classes):
    batch = x.shape[0]
    # fc1 / fc2: Linear + ReLU (+ Dropout == identity at inference); bf16 out
    # so the next layer consumes it directly (halves intermediate HBM traffic).
    h = pallas_linear(x, params["w1"], params["b1"],
                      apply_relu=True, out_dtype=jnp.bfloat16)
    h = pallas_linear(h, params["w2"], params["b2"],
                      apply_relu=True, out_dtype=jnp.bfloat16)
    # fc3: plain Linear, f32 out.
    y = pallas_linear(h, params["w3"], params["b3"],
                      apply_relu=False, out_dtype=jnp.float32)
    return y[:batch, :classes]


def _ref_dense(x, w, b, relu):
    # Reference with identical bf16-input / f32-accumulate numerics.
    y = jnp.dot(x.astype(jnp.bfloat16), w.astype(jnp.bfloat16),
                preferred_element_type=jnp.float32) + b
    return jnp.maximum(y, 0.0) if relu else y


if __name__ == "__main__":
    # Small shapes consistent with the module's forward: x is (batch, in_channels).
    batch = 2
    in_channels = 64
    classes = 10
    mid_channels = 256  # module hardcodes 4096; reduced for a small synthetic test

    key = jax.random.PRNGKey(0)
    k_x, k_p = jax.random.split(key)
    x = jax.random.normal(k_x, (batch, in_channels), jnp.float32)
    params = init_params(k_p, in_channels, classes, mid_channels=mid_channels)

    y = vgg_output_block(x, params, classes=classes)
    y = jax.block_until_ready(y)

    # Reference in plain JAX, matching bf16 compute / f32 accumulation and the
    # bf16 rounding of the fc1/fc2 intermediates.
    Kp1 = params["w1"].shape[0]
    xr = jnp.pad(x, ((0, 0), (0, Kp1 - in_channels)))
    ref = _ref_dense(xr, params["w1"], params["b1"], True).astype(jnp.bfloat16)
    ref = _ref_dense(ref, params["w2"], params["b2"], True).astype(jnp.bfloat16)
    ref = _ref_dense(ref, params["w3"], params["b3"], False)[:, :classes]

    assert y.shape == (batch, classes)
    assert jnp.allclose(y, ref, atol=1e-2, rtol=1e-2), (
        f"max abs err = {jnp.max(jnp.abs(y - ref))}")

    # Also exercise the K-reduction (nk > 1) accumulator kernel path.
    xt = jax.random.normal(jax.random.PRNGKey(1), (4, mid_channels), jnp.float32)
    yt = pallas_linear(xt, params["w2"], params["b2"], apply_relu=True,
                       out_dtype=jnp.float32, tk_max=128)
    yt = jax.block_until_ready(yt)[:4]
    rt = _ref_dense(xt, params["w2"], params["b2"], True)
    assert jnp.allclose(yt, rt, atol=1e-2, rtol=1e-2), (
        f"max abs err (acc path) = {jnp.max(jnp.abs(yt - rt))}")

    print("KERNEL_OK")
</pallas_src>

<mosaic_0001>
module attributes {stable_mosaic.version = 11 : i64} {
  func.func @_linear_kernel_noacc(%arg0: i32, %arg1: i32, %arg2: memref<16x128xbf16, #tpu.memory_space<vmem>>, %arg3: memref<128x256xbf16, #tpu.memory_space<vmem>>, %arg4: memref<1x256xf32, #tpu.memory_space<vmem>>, %arg5: memref<16x256xbf16, #tpu.memory_space<vmem>>) attributes {dimension_semantics = [#tpu.dimension_semantics<parallel>, #tpu.dimension_semantics<parallel>], iteration_bounds = array<i64: 1, 1>, scalar_prefetch = 0 : i64, scratch_operands = 0 : i64, tpu.core_type = #tpu.core_type<tc>, window_params = [{transform_indices = @transform_0, window_bounds = array<i64: 16, 128>}, {transform_indices = @transform_1, window_bounds = array<i64: 128, 256>}, {transform_indices = @transform_2, window_bounds = array<i64: 1, 256>}, {transform_indices = @transform_3, window_bounds = array<i64: 16, 256>}]} {
    %c0 = arith.constant 0 : index
    %c0_0 = arith.constant 0 : index
    %0 = vector.load %arg2[%c0, %c0_0] : memref<16x128xbf16, #tpu.memory_space<vmem>>, vector<16x128xbf16>
    %c0_1 = arith.constant 0 : index
    %c0_2 = arith.constant 0 : index
    %1 = vector.load %arg3[%c0_1, %c0_2] : memref<128x256xbf16, #tpu.memory_space<vmem>>, vector<128x256xbf16>
    %cst = arith.constant dense<0.000000e+00> : vector<16x256xf32>
    %2 = tpu.matmul %0, %1, %cst {dimension_numbers = #tpu.dot_dimension_numbers<[1], [0], [0], [1], [0, 0, 1, 1], [], []>} : vector<16x128xbf16>, vector<128x256xbf16>, vector<16x256xf32> -> vector<16x256xf32>
    %c0_3 = arith.constant 0 : index
    %c0_4 = arith.constant 0 : index
    %3 = vector.load %arg4[%c0_3, %c0_4] : memref<1x256xf32, #tpu.memory_space<vmem>>, vector<1x256xf32>
    %4 = vector.broadcast %3 : vector<1x256xf32> to vector<16x256xf32>
    %5 = arith.addf %2, %4 : vector<16x256xf32>
    %cst_5 = arith.constant 0.000000e+00 : f32
    %6 = vector.broadcast %cst_5 : f32 to vector<16x256xf32>
    %7 = arith.maximumf %5, %6 : vector<16x256xf32>
    %8 = arith.truncf %7 : vector<16x256xf32> to vector<16x256xbf16>
    %c0_6 = arith.constant 0 : index
    %c0_7 = arith.constant 0 : index
    %9 = vector.load %arg5[%c0_6, %c0_7] : memref<16x256xbf16, #tpu.memory_space<vmem>>, vector<16x256xbf16>
    tpu.vector_store %arg5[%c0_6, %c0_7], %8 {strides = array<i32>} : memref<16x256xbf16, #tpu.memory_space<vmem>>, vector<16x256xbf16>,
    return
  }
  func.func @transform_0(%arg0: i32, %arg1: i32) -> (i32, i32) {
    %c0_i32 = arith.constant 0 : i32
    %c0_i32_0 = arith.constant 0 : i32
    return %arg0, %c0_i32 : i32, i32
  }
  func.func @transform_1(%arg0: i32, %arg1: i32) -> (i32, i32) {
    %c0_i32 = arith.constant 0 : i32
    %c0_i32_0 = arith.constant 0 : i32
    return %c0_i32, %arg1 : i32, i32
  }
  func.func @transform_2(%arg0: i32, %arg1: i32) -> (i32, i32) {
    %c0_i32 = arith.constant 0 : i32
    %c0_i32_0 = arith.constant 0 : i32
    return %c0_i32, %arg1 : i32, i32
  }
  func.func @transform_3(%arg0: i32, %arg1: i32) -> (i32, i32) {
    %c0_i32 = arith.constant 0 : i32
    return %arg0, %arg1 : i32, i32
  }
}

module attributes {stable_mosaic.version = 11 : i64} {
  func.func @_linear_kernel_noacc(%arg0: i32, %arg1: i32, %arg2: memref<16x256xbf16, #tpu.memory_space<vmem>>, %arg3: memref<256x256xbf16, #tpu.memory_space<vmem>>, %arg4: memref<1x256xf32, #tpu.memory_space<vmem>>, %arg5: memref<16x256xbf16, #tpu.memory_space<vmem>>) attributes {dimension_semantics = [#tpu.dimension_semantics<parallel>, #tpu.dimension_semantics<parallel>], iteration_bounds = array<i64: 1, 1>, scalar_prefetch = 0 : i64, scratch_operands = 0 : i64, tpu.core_type = #tpu.core_type<tc>, window_params = [{transform_indices = @transform_0, window_bounds = array<i64: 16, 256>}, {transform_indices = @transform_1, window_bounds = array<i64: 256, 256>}, {transform_indices = @transform_2, window_bounds = array<i64: 1, 256>}, {transform_indices = @transform_3, window_bounds = array<i64: 16, 256>}]} {
    %c0 = arith.constant 0 : index
    %c0_0 = arith.constant 0 : index
    %0 = vector.load %arg2[%c0, %c0_0] : memref<16x256xbf16, #tpu.memory_space<vmem>>, vector<16x256xbf16>
    %c0_1 = arith.constant 0 : index
    %c0_2 = arith.constant 0 : index
    %1 = vector.load %arg3[%c0_1, %c0_2] : memref<256x256xbf16, #tpu.memory_space<vmem>>, vector<256x256xbf16>
    %cst = arith.constant dense<0.000000e+00> : vector<16x256xf32>
    %2 = tpu.matmul %0, %1, %cst {dimension_numbers = #tpu.dot_dimension_numbers<[1], [0], [0], [1], [0, 0, 1, 1], [], []>} : vector<16x256xbf16>, vector<256x256xbf16>, vector<16x256xf32> -> vector<16x256xf32>
    %c0_3 = arith.constant 0 : index
    %c0_4 = arith.constant 0 : index
    %3 = vector.load %arg4[%c0_3, %c0_4] : memref<1x256xf32, #tpu.memory_space<vmem>>, vector<1x256xf32>
    %4 = vector.broadcast %3 : vector<1x256xf32> to vector<16x256xf32>
    %5 = arith.addf %2, %4 : vector<16x256xf32>
    %cst_5 = arith.constant 0.000000e+00 : f32
    %6 = vector.broadcast %cst_5 : f32 to vector<16x256xf32>
    %7 = arith.maximumf %5, %6 : vector<16x256xf32>
    %8 = arith.truncf %7 : vector<16x256xf32> to vector<16x256xbf16>
    %c0_6 = arith.constant 0 : index
    %c0_7 = arith.constant 0 : index
    %9 = vector.load %arg5[%c0_6, %c0_7] : memref<16x256xbf16, #tpu.memory_space<vmem>>, vector<16x256xbf16>
    tpu.vector_store %arg5[%c0_6, %c0_7], %8 {strides = array<i32>} : memref<16x256xbf16, #tpu.memory_space<vmem>>, vector<16x256xbf16>,
    return
  }
  func.func @transform_0(%arg0: i32, %arg1: i32) -> (i32, i32) {
    %c0_i32 = arith.constant 0 : i32
    %c0_i32_0 = arith.constant 0 : i32
    return %arg0, %c0_i32 : i32, i32
  }
  func.func @transform_1(%arg0: i32, %arg1: i32) -> (i32, i32) {
    %c0_i32 = arith.constant 0 : i32
    %c0_i32_0 = arith.constant 0 : i32
    return %c0_i32, %arg1 : i32, i32
  }
  func.func @transform_2(%arg0: i32, %arg1: i32) -> (i32, i32) {
    %c0_i32 = arith.constant 0 : i32
    %c0_i32_0 = arith.constant 0 : i32
    return %c0_i32, %arg1 : i32, i32
  }
  func.func @transform_3(%arg0: i32, %arg1: i32) -> (i32, i32) {
    %c0_i32 = arith.constant 0 : i32
    return %arg0, %arg1 : i32, i32
  }
}

module attributes {stable_mosaic.version = 11 : i64} {
  func.func @_linear_kernel_noacc(%arg0: i32, %arg1: i32, %arg2: memref<16x256xbf16, #tpu.memory_space<vmem>>, %arg3: memref<256x128xbf16, #tpu.memory_space<vmem>>, %arg4: memref<1x128xf32, #tpu.memory_space<vmem>>, %arg5: memref<16x128xf32, #tpu.memory_space<vmem>>) attributes {dimension_semantics = [#tpu.dimension_semantics<parallel>, #tpu.dimension_semantics<parallel>], iteration_bounds = array<i64: 1, 1>, scalar_prefetch = 0 : i64, scratch_operands = 0 : i64, tpu.core_type = #tpu.core_type<tc>, window_params = [{transform_indices = @transform_0, window_bounds = array<i64: 16, 256>}, {transform_indices = @transform_1, window_bounds = array<i64: 256, 128>}, {transform_indices = @transform_2, window_bounds = array<i64: 1, 128>}, {transform_indices = @transform_3, window_bounds = array<i64: 16, 128>}]} {
    %c0 = arith.constant 0 : index
    %c0_0 = arith.constant 0 : index
    %0 = vector.load %arg2[%c0, %c0_0] : memref<16x256xbf16, #tpu.memory_space<vmem>>, vector<16x256xbf16>
    %c0_1 = arith.constant 0 : index
    %c0_2 = arith.constant 0 : index
    %1 = vector.load %arg3[%c0_1, %c0_2] : memref<256x128xbf16, #tpu.memory_space<vmem>>, vector<256x128xbf16>
    %cst = arith.constant dense<0.000000e+00> : vector<16x128xf32>
    %2 = tpu.matmul %0, %1, %cst {dimension_numbers = #tpu.dot_dimension_numbers<[1], [0], [0], [1], [0, 0, 1, 1], [], []>} : vector<16x256xbf16>, vector<256x128xbf16>, vector<16x128xf32> -> vector<16x128xf32>
    %c0_3 = arith.constant 0 : index
    %c0_4 = arith.constant 0 : index
    %3 = vector.load %arg4[%c0_3, %c0_4] : memref<1x128xf32, #tpu.memory_space<vmem>>, vector<1x128xf32>
    %4 = vector.broadcast %3 : vector<1x128xf32> to vector<16x128xf32>
    %5 = arith.addf %2, %4 : vector<16x128xf32>
    %c0_5 = arith.constant 0 : index
    %c0_6 = arith.constant 0 : index
    %6 = vector.load %arg5[%c0_5, %c0_6] : memref<16x128xf32, #tpu.memory_space<vmem>>, vector<16x128xf32>
    tpu.vector_store %arg5[%c0_5, %c0_6], %5 {strides = array<i32>} : memref<16x128xf32, #tpu.memory_space<vmem>>, vector<16x128xf32>,
    return
  }
  func.func @transform_0(%arg0: i32, %arg1: i32) -> (i32, i32) {
    %c0_i32 = arith.constant 0 : i32
    %c0_i32_0 = arith.constant 0 : i32
    return %arg0, %c0_i32 : i32, i32
  }
  func.func @transform_1(%arg0: i32, %arg1: i32) -> (i32, i32) {
    %c0_i32 = arith.constant 0 : i32
    %c0_i32_0 = arith.constant 0 : i32
    return %c0_i32, %arg1 : i32, i32
  }
  func.func @transform_2(%arg0: i32, %arg1: i32) -> (i32, i32) {
    %c0_i32 = arith.constant 0 : i32
    %c0_i32_0 = arith.constant 0 : i32
    return %c0_i32, %arg1 : i32, i32
  }
  func.func @transform_3(%arg0: i32, %arg1: i32) -> (i32, i32) {
    %c0_i32 = arith.constant 0 : i32
    return %arg0, %arg1 : i32, i32
  }
}

</mosaic_0001>

<llo_original>
// kernel: vgg_output_block.3
$region0: #{vgg_output_block.3}
  #allocation0 [shape = 'u32[]', space=smem, size = 0x4, offset = 0x4, fixed_abs, tag = 'smem constant byte address 0x4 - core index']
  #allocation1 [shape = 'u32[144,128]{1,0:T(1,128)}', space=vmem, size = 0x12000, scoped, tag = 'internal scratch']
  %s0 = inlined_call_operand.vmem [shape: bf16[16,128], index: 0, kind: input, shape index: {}]
  %s1 = inlined_call_operand.hbm [shape: bf16[128,256], index: 1, kind: input, shape index: {}]
  %s2 = inlined_call_operand.vmem [shape: f32[1,256], index: 2, kind: input, shape index: {}]
  %s3 = inlined_call_operand.vmem [shape: bf16[16,256], index: 3, kind: output, shape index: {}]
  %s4 = sld [smem:[#allocation0]]
  $region26: #{vgg_output_block.3} parent=0
    _
  %s6 = ssub.s32 1, %s4
  %s7 = scalar_select 0, %s6, %s4
  $region1: #{vgg_output_block.3} parent=0
    #allocation2 [shape = 'u8[65536]{0}', space=vmem, size = 0x10000, scoped, tag = 'input window, operand 1, single buffered']
    #allocation3 [shape = 's32[1]{0}', space=sflag, size = 0x4, scoped, tag = 'scoped memory for vgg_output_block.3']
    %8 = vsyncpa [#allocation3], 0
    // Predicated region
    $region2: #{vgg_output_block.3} parent=1 // pred_check
      _
    $region3: #{vgg_output_block.3} parent=1 // pred_check_branch
      %10 = sbr.rel (0) target = $region5
    $region4: #{vgg_output_block.3} parent=1 // pred_region
      _
    $region5: #{vgg_output_block.3} parent=1 // pred_fallthru
      _
    // Predicated region
    $region6: #{vgg_output_block.3} parent=1 // pred_check
      _
    $region7: #{vgg_output_block.3} parent=1 // pred_check_branch
      %12 = sbr.rel (0) target = $region9
    $region8: #{vgg_output_block.3} parent=1 // pred_region
      %s14 = ssub.s32 2048, 2048
      %15 = vsyncadd [#allocation3], %s14
      %s16 = sshll.u32 [#allocation2], 4
      %s17 = int_to_ptr.vmem [resolvable:$true] %s16
      %22 = dma.hbm_to_vmem [thread:$0]  %s1, 2048, %s17, [#allocation3], 128, 128, 8
    $region9: #{vgg_output_block.3} parent=1 // pred_fallthru
      _
    // Predicated region
    $region10: #{vgg_output_block.3} parent=1 // pred_check
      _
    $region11: #{vgg_output_block.3} parent=1 // pred_check_branch
      %24 = sbr.rel (0) target = $region13
    $region12: #{vgg_output_block.3} parent=1 // pred_region
      _
    $region13: #{vgg_output_block.3} parent=1 // pred_fallthru
      _
    // Predicated region
    $region14: #{vgg_output_block.3} parent=1 // pred_check
      _
    $region15: #{vgg_output_block.3} parent=1 // pred_check_branch
      %26 = sbr.rel (0) target = $region17
    $region16: #{vgg_output_block.3} parent=1 // pred_region
      %27 = dma.done [#allocation3], 2048
    $region17: #{vgg_output_block.3} parent=1 // pred_fallthru
      _
    %v29 = vld [vmem:[%s0] sm:$0xf]
    %v30 = vld [vmem:[%s0 + $0x4] sm:$0xf]
    %v31 = vld [vmem:[#allocation2] sm:$0xff]
    %v32 = vld [vmem:[#allocation2 + $0x8] sm:$0xff]
    %v33 = vld [vmem:[#allocation2 + $0x10] sm:$0xff]
    %v34 = vld [vmem:[#allocation2 + $0x18] sm:$0xff]
    %v35 = vld [vmem:[#allocation2 + $0x20] sm:$0xff]
    %v36 = vld [vmem:[#allocation2 + $0x28] sm:$0xff]
    %v37 = vld [vmem:[#allocation2 + $0x30] sm:$0xff]
    %v38 = vld [vmem:[#allocation2 + $0x38] sm:$0xff]
    %v39 = vld [vmem:[#allocation2 + $0x40] sm:$0xff]
    %v40 = vld [vmem:[#allocation2 + $0x48] sm:$0xff]
    %v41 = vld [vmem:[#allocation2 + $0x50] sm:$0xff]
    %v42 = vld [vmem:[#allocation2 + $0x58] sm:$0xff]
    %v43 = vld [vmem:[#allocation2 + $0x60] sm:$0xff]
    %v44 = vld [vmem:[#allocation2 + $0x68] sm:$0xff]
    %v45 = vld [vmem:[#allocation2 + $0x70] sm:$0xff]
    %v46 = vld [vmem:[#allocation2 + $0x78] sm:$0xff]
    %v47 = vld [vmem:[%s2] sm:$0x3]
    %v49 = vlaneseq
    %v50 = vshrl.u32 %v49, 7
    %v51 = vsub.s32 0, %v50
    %v52 = vrot.slane %v47, %v51
    %v53 = vlaneseq
    %v54 = vshrl.u32 %v53, 7
    %v55 = vsub.s32 1, %v54
    %v56 = vrot.slane %v47, %v55
    %v61 = vunpack.c.l.b16 %v29
    %v62 = vunpack.c.l.b16 %v30
    %v63 = vpack.c.b16 %v62, %v61
    %v81 = vunpack.c.l.b16 %v31
    %v82 = vunpack.c.h.b16 %v31
    %v83 = vunpack.c.l.b16 %v32
    %v84 = vunpack.c.h.b16 %v32
    %v85 = vunpack.c.l.b16 %v33
    %v86 = vunpack.c.h.b16 %v33
    %v87 = vunpack.c.l.b16 %v34
    %v88 = vunpack.c.h.b16 %v34
    %v89 = vunpack.c.l.b16 %v35
    %v90 = vunpack.c.h.b16 %v35
    %v91 = vunpack.c.l.b16 %v36
    %v92 = vunpack.c.h.b16 %v36
    %v93 = vunpack.c.l.b16 %v37
    %v94 = vunpack.c.h.b16 %v37
    %v95 = vunpack.c.l.b16 %v38
    %v96 = vunpack.c.h.b16 %v38
    %v97 = vunpack.c.l.b16 %v39
    %v98 = vunpack.c.h.b16 %v39
    %v99 = vunpack.c.l.b16 %v40
    %v100 = vunpack.c.h.b16 %v40
    %v101 = vunpack.c.l.b16 %v41
    %v102 = vunpack.c.h.b16 %v41
    %v103 = vunpack.c.l.b16 %v42
    %v104 = vunpack.c.h.b16 %v42
    %v105 = vunpack.c.l.b16 %v43
    %v106 = vunpack.c.h.b16 %v43
    %v107 = vunpack.c.l.b16 %v44
    %v108 = vunpack.c.h.b16 %v44
    %v109 = vunpack.c.l.b16 %v45
    %v110 = vunpack.c.h.b16 %v45
    %v111 = vunpack.c.l.b16 %v46
    %v112 = vunpack.c.h.b16 %v46
    %v113 = vpack.c.b16 %v83, %v81
    %v114 = vpack.c.b16 %v84, %v82
    %v115 = vpack.c.b16 %v87, %v85
    %v116 = vpack.c.b16 %v88, %v86
    %v117 = vpack.c.b16 %v91, %v89
    %v118 = vpack.c.b16 %v92, %v90
    %v119 = vpack.c.b16 %v95, %v93
    %v120 = vpack.c.b16 %v96, %v94
    %v121 = vpack.c.b16 %v99, %v97
    %v122 = vpack.c.b16 %v100, %v98
    %v123 = vpack.c.b16 %v103, %v101
    %v124 = vpack.c.b16 %v104, %v102
    %v125 = vpack.c.b16 %v107, %v105
    %v126 = vpack.c.b16 %v108, %v106
    %v127 = vpack.c.b16 %v111, %v109
    %v128 = vpack.c.b16 %v112, %v110
    %145 = vmatprep.subr.bf16.mxu0 %v114
    %146 = vmatpush1.bf16.msra.mxu0 %v113
    %147 = vmatprep.subr.bf16.mxu0 %v116
    %148 = vmatpush1.bf16.msra.mxu0 %v115
    %149 = vmatprep.subr.bf16.mxu0 %v118
    %150 = vmatpush1.bf16.msra.mxu0 %v117
    %151 = vmatprep.subr.bf16.mxu0 %v120
    %152 = vmatpush1.bf16.msra.mxu0 %v119
    %153 = vmatprep.subr.bf16.mxu0 %v122
    %154 = vmatpush1.bf16.msra.mxu0 %v121
    %155 = vmatprep.subr.bf16.mxu0 %v124
    %156 = vmatpush1.bf16.msra.mxu0 %v123
    %157 = vmatprep.subr.bf16.mxu0 %v126
    %158 = vmatpush1.bf16.msra.mxu0 %v125
    %159 = vmatprep.subr.bf16.mxu0 %v128
    %160 = vmatpush1.bf16.msra.mxu0 %v127
    %161 = vmatprep.subr.bf16.mxu0 0
    %162 = vmatpush1.bf16.msra.mxu0 0
    %163 = vmatprep.subr.bf16.mxu0 0
    %164 = vmatpush1.bf16.msra.mxu0 0
    %165 = vmatprep.subr.bf16.mxu0 0
    %166 = vmatpush1.bf16.msra.mxu0 0
    %167 = vmatprep.subr.bf16.mxu0 0
    %168 = vmatpush1.bf16.msra.mxu0 0
    %169 = vmatprep.subr.bf16.mxu0 0
    %170 = vmatpush1.bf16.msra.mxu0 0
    %171 = vmatprep.subr.bf16.mxu0 0
    %172 = vmatpush1.bf16.msra.mxu0 0
    %173 = vmatprep.subr.bf16.mxu0 0
    %174 = vmatpush1.bf16.msra.mxu0 0
    %175 = vmatprep.subr.bf16.mxu0 0
    %176 = vmatpush1.bf16.msra.mxu0 0
    %177 = vmatprep.mubr.bf16.mxu0 0
    %178 = vmatmul.mubr.bf16.gmra.mrb[0].mxu0 %v63
    %v179 = vpop.f32.mrb[0].mxu0
    %v180 = vadd.f32 %v52, %v179
    %v181 = vpop.f32.mrb[0].mxu0
    %v182 = vadd.f32 %v56, %v181
    %v183 = vpop.f32.mrb[0].mxu0
    %v184 = vadd.f32 %v52, %v183
    %v185 = vpop.f32.mrb[0].mxu0
    %v186 = vadd.f32 %v56, %v185
    %187 = vdwg.mxu0
    %v188 = vmax.f32 %v180, 0.0
    %v189 = vmax.f32 %v182, 0.0
    %v190 = vmax.f32 %v184, 0.0
    %v191 = vmax.f32 %v186, 0.0
    %v192 = vpack.c.bf16 %v190, %v188
    %v193 = vpack.c.bf16 %v191, %v189
    %v196 = vunpack.c.l.b16 %v192
    %v197 = vunpack.c.l.b16 %v193
    %v198 = vunpack.c.h.b16 %v192
    %v199 = vunpack.c.h.b16 %v193
    %v200 = vpack.c.b16 %v197, %v196
    %v201 = vpack.c.b16 %v199, %v198
    %204 = vst [vmem:[%s3] sm:$0xff] %v200
    %205 = vst [vmem:[%s3 + $0x8] sm:$0xff] %v201
    // Predicated region
    $region18: #{vgg_output_block.3} parent=1 // pred_check
      _
    $region19: #{vgg_output_block.3} parent=1 // pred_check_branch
      %207 = sbr.rel (0) target = $region21
    $region20: #{vgg_output_block.3} parent=1 // pred_region
      _
    $region21: #{vgg_output_block.3} parent=1 // pred_fallthru
      _
    // Predicated region
    $region22: #{vgg_output_block.3} parent=1 // pred_check
      _
    $region23: #{vgg_output_block.3} parent=1 // pred_check_branch
      %209 = sbr.rel (0) target = $region25
    $region24: #{vgg_output_block.3} parent=1 // pred_region
      _
    $region25: #{vgg_output_block.3} parent=1 // pred_fallthru
      _
    %210 = vsyncpa [#allocation3], 1

// kernel: vgg_output_block.4
$region0: #{vgg_output_block.4}
  #allocation0 [shape = 'u32[]', space=smem, size = 0x4, offset = 0x4, fixed_abs, tag = 'smem constant byte address 0x4 - core index']
  #allocation1 [shape = 'u32[144,128]{1,0:T(1,128)}', space=vmem, size = 0x12000, scoped, tag = 'internal scratch']
  %s0 = inlined_call_operand.vmem [shape: bf16[16,256], index: 0, kind: input, shape index: {}]
  %s1 = inlined_call_operand.hbm [shape: bf16[256,256], index: 1, kind: input, shape index: {}]
  %s2 = inlined_call_operand.vmem [shape: f32[1,256], index: 2, kind: input, shape index: {}]
  %s3 = inlined_call_operand.vmem [shape: bf16[16,256], index: 3, kind: output, shape index: {}]
  %s4 = sld [smem:[#allocation0]]
  $region26: #{vgg_output_block.4} parent=0
    _
  %s6 = ssub.s32 1, %s4
  %s7 = scalar_select 0, %s6, %s4
  $region1: #{vgg_output_block.4} parent=0
    #allocation2 [shape = 'u8[131072]{0}', space=vmem, size = 0x20000, scoped, tag = 'input window, operand 1, single buffered']
    #allocation3 [shape = 's32[1]{0}', space=sflag, size = 0x4, scoped, tag = 'scoped memory for vgg_output_block.4']
    %8 = vsyncpa [#allocation3], 0
    // Predicated region
    $region2: #{vgg_output_block.4} parent=1 // pred_check
      _
    $region3: #{vgg_output_block.4} parent=1 // pred_check_branch
      %10 = sbr.rel (0) target = $region5
    $region4: #{vgg_output_block.4} parent=1 // pred_region
      _
    $region5: #{vgg_output_block.4} parent=1 // pred_fallthru
      _
    // Predicated region
    $region6: #{vgg_output_block.4} parent=1 // pred_check
      _
    $region7: #{vgg_output_block.4} parent=1 // pred_check_branch
      %12 = sbr.rel (0) target = $region9
    $region8: #{vgg_output_block.4} parent=1 // pred_region
      %s14 = ssub.s32 4096, 4096
      %15 = vsyncadd [#allocation3], %s14
      %s16 = sshll.u32 [#allocation2], 4
      %s17 = int_to_ptr.vmem [resolvable:$true] %s16
      %22 = dma.hbm_to_vmem [thread:$0]  %s1, 4096, %s17, [#allocation3], 128, 128, 8
    $region9: #{vgg_output_block.4} parent=1 // pred_fallthru
      _
    // Predicated region
    $region10: #{vgg_output_block.4} parent=1 // pred_check
      _
    $region11: #{vgg_output_block.4} parent=1 // pred_check_branch
      %24 = sbr.rel (0) target = $region13
    $region12: #{vgg_output_block.4} parent=1 // pred_region
      _
    $region13: #{vgg_output_block.4} parent=1 // pred_fallthru
      _
    // Predicated region
    $region14: #{vgg_output_block.4} parent=1 // pred_check
      _
    $region15: #{vgg_output_block.4} parent=1 // pred_check_branch
      %26 = sbr.rel (0) target = $region17
    $region16: #{vgg_output_block.4} parent=1 // pred_region
      %27 = dma.done [#allocation3], 4096
    $region17: #{vgg_output_block.4} parent=1 // pred_fallthru
      _
    %v28 = vld [vmem:[%s0] sm:$0xff]
    %v29 = vld [vmem:[%s0 + $0x8] sm:$0xff]
    %v30 = vld [vmem:[#allocation2] sm:$0xff]
    %v31 = vld [vmem:[#allocation2 + $0x8] sm:$0xff]
    %v32 = vld [vmem:[#allocation2 + $0x10] sm:$0xff]
    %v33 = vld [vmem:[#allocation2 + $0x18] sm:$0xff]
    %v34 = vld [vmem:[#allocation2 + $0x20] sm:$0xff]
    %v35 = vld [vmem:[#allocation2 + $0x28] sm:$0xff]
    %v36 = vld [vmem:[#allocation2 + $0x30] sm:$0xff]
    %v37 = vld [vmem:[#allocation2 + $0x38] sm:$0xff]
    %v38 = vld [vmem:[#allocation2 + $0x40] sm:$0xff]
    %v39 = vld [vmem:[#allocation2 + $0x48] sm:$0xff]
    %v40 = vld [vmem:[#allocation2 + $0x50] sm:$0xff]
    %v41 = vld [vmem:[#allocation2 + $0x58] sm:$0xff]
    %v42 = vld [vmem:[#allocation2 + $0x60] sm:$0xff]
    %v43 = vld [vmem:[#allocation2 + $0x68] sm:$0xff]
    %v44 = vld [vmem:[#allocation2 + $0x70] sm:$0xff]
    %v45 = vld [vmem:[#allocation2 + $0x78] sm:$0xff]
    %v46 = vld [vmem:[#allocation2 + $0x80] sm:$0xff]
    %v47 = vld [vmem:[#allocation2 + $0x88] sm:$0xff]
    %v48 = vld [vmem:[#allocation2 + $0x90] sm:$0xff]
    %v49 = vld [vmem:[#allocation2 + $0x98] sm:$0xff]
    %v50 = vld [vmem:[#allocation2 + $0xa0] sm:$0xff]
    %v51 = vld [vmem:[#allocation2 + $0xa8] sm:$0xff]
    %v52 = vld [vmem:[#allocation2 + $0xb0] sm:$0xff]
    %v53 = vld [vmem:[#allocation2 + $0xb8] sm:$0xff]
    %v54 = vld [vmem:[#allocation2 + $0xc0] sm:$0xff]
    %v55 = vld [vmem:[#allocation2 + $0xc8] sm:$0xff]
    %v56 = vld [vmem:[#allocation2 + $0xd0] sm:$0xff]
    %v57 = vld [vmem:[#allocation2 + $0xd8] sm:$0xff]
    %v58 = vld [vmem:[#allocation2 + $0xe0] sm:$0xff]
    %v59 = vld [vmem:[#allocation2 + $0xe8] sm:$0xff]
    %v60 = vld [vmem:[#allocation2 + $0xf0] sm:$0xff]
    %v61 = vld [vmem:[#allocation2 + $0xf8] sm:$0xff]
    %v62 = vld [vmem:[%s2] sm:$0x3]
    %v64 = vlaneseq
    %v65 = vshrl.u32 %v64, 7
    %v66 = vsub.s32 0, %v65
    %v67 = vrot.slane %v62, %v66
    %v68 = vlaneseq
    %v69 = vshrl.u32 %v68, 7
    %v70 = vsub.s32 1, %v69
    %v71 = vrot.slane %v62, %v70
    %v76 = vunpack.c.l.b16 %v28
    %v77 = vunpack.c.h.b16 %v28
    %v78 = vunpack.c.l.b16 %v29
    %v79 = vunpack.c.h.b16 %v29
    %v80 = vpack.c.b16 %v78, %v76
    %v81 = vpack.c.b16 %v79, %v77
    %v116 = vunpack.c.l.b16 %v30
    %v117 = vunpack.c.h.b16 %v30
    %v118 = vunpack.c.l.b16 %v31
    %v119 = vunpack.c.h.b16 %v31
    %v120 = vunpack.c.l.b16 %v32
    %v121 = vunpack.c.h.b16 %v32
    %v122 = vunpack.c.l.b16 %v33
    %v123 = vunpack.c.h.b16 %v33
    %v124 = vunpack.c.l.b16 %v34
    %v125 = vunpack.c.h.b16 %v34
    %v126 = vunpack.c.l.b16 %v35
    %v127 = vunpack.c.h.b16 %v35
    %v128 = vunpack.c.l.b16 %v36
    %v129 = vunpack.c.h.b16 %v36
    %v130 = vunpack.c.l.b16 %v37
    %v131 = vunpack.c.h.b16 %v37
    %v132 = vunpack.c.l.b16 %v38
    %v133 = vunpack.c.h.b16 %v38
    %v134 = vunpack.c.l.b16 %v39
    %v135 = vunpack.c.h.b16 %v39
    %v136 = vunpack.c.l.b16 %v40
    %v137 = vunpack.c.h.b16 %v40
    %v138 = vunpack.c.l.b16 %v41
    %v139 = vunpack.c.h.b16 %v41
    %v140 = vunpack.c.l.b16 %v42
    %v141 = vunpack.c.h.b16 %v42
    %v142 = vunpack.c.l.b16 %v43
    %v143 = vunpack.c.h.b16 %v43
    %v144 = vunpack.c.l.b16 %v44
    %v145 = vunpack.c.h.b16 %v44
    %v146 = vunpack.c.l.b16 %v45
    %v147 = vunpack.c.h.b16 %v45
    %v148 = vunpack.c.l.b16 %v46
    %v149 = vunpack.c.h.b16 %v46
    %v150 = vunpack.c.l.b16 %v47
    %v151 = vunpack.c.h.b16 %v47
    %v152 = vunpack.c.l.b16 %v48
    %v153 = vunpack.c.h.b16 %v48
    %v154 = vunpack.c.l.b16 %v49
    %v155 = vunpack.c.h.b16 %v49
    %v156 = vunpack.c.l.b16 %v50
    %v157 = vunpack.c.h.b16 %v50
    %v158 = vunpack.c.l.b16 %v51
    %v159 = vunpack.c.h.b16 %v51
    %v160 = vunpack.c.l.b16 %v52
    %v161 = vunpack.c.h.b16 %v52
    %v162 = vunpack.c.l.b16 %v53
    %v163 = vunpack.c.h.b16 %v53
    %v164 = vunpack.c.l.b16 %v54
    %v165 = vunpack.c.h.b16 %v54
    %v166 = vunpack.c.l.b16 %v55
    %v167 = vunpack.c.h.b16 %v55
    %v168 = vunpack.c.l.b16 %v56
    %v169 = vunpack.c.h.b16 %v56
    %v170 = vunpack.c.l.b16 %v57
    %v171 = vunpack.c.h.b16 %v57
    %v172 = vunpack.c.l.b16 %v58
    %v173 = vunpack.c.h.b16 %v58
    %v174 = vunpack.c.l.b16 %v59
    %v175 = vunpack.c.h.b16 %v59
    %v176 = vunpack.c.l.b16 %v60
    %v177 = vunpack.c.h.b16 %v60
    %v178 = vunpack.c.l.b16 %v61
    %v179 = vunpack.c.h.b16 %v61
    %v180 = vpack.c.b16 %v118, %v116
    %v181 = vpack.c.b16 %v119, %v117
    %v182 = vpack.c.b16 %v122, %v120
    %v183 = vpack.c.b16 %v123, %v121
    %v184 = vpack.c.b16 %v126, %v124
    %v185 = vpack.c.b16 %v127, %v125
    %v186 = vpack.c.b16 %v130, %v128
    %v187 = vpack.c.b16 %v131, %v129
    %v188 = vpack.c.b16 %v134, %v132
    %v189 = vpack.c.b16 %v135, %v133
    %v190 = vpack.c.b16 %v138, %v136
    %v191 = vpack.c.b16 %v139, %v137
    %v192 = vpack.c.b16 %v142, %v140
    %v193 = vpack.c.b16 %v143, %v141
    %v194 = vpack.c.b16 %v146, %v144
    %v195 = vpack.c.b16 %v147, %v145
    %v196 = vpack.c.b16 %v150, %v148
    %v197 = vpack.c.b16 %v151, %v149
    %v198 = vpack.c.b16 %v154, %v152
    %v199 = vpack.c.b16 %v155, %v153
    %v200 = vpack.c.b16 %v158, %v156
    %v201 = vpack.c.b16 %v159, %v157
    %v202 = vpack.c.b16 %v162, %v160
    %v203 = vpack.c.b16 %v163, %v161
    %v204 = vpack.c.b16 %v166, %v164
    %v205 = vpack.c.b16 %v167, %v165
    %v206 = vpack.c.b16 %v170, %v168
    %v207 = vpack.c.b16 %v171, %v169
    %v208 = vpack.c.b16 %v174, %v172
    %v209 = vpack.c.b16 %v175, %v173
    %v210 = vpack.c.b16 %v178, %v176
    %v211 = vpack.c.b16 %v179, %v177
    %244 = vmatprep.subr.bf16.mxu0 %v181
    %245 = vmatpush1.bf16.msra.mxu0 %v180
    %246 = vmatprep.subr.bf16.mxu0 %v183
    %247 = vmatpush1.bf16.msra.mxu0 %v182
    %248 = vmatprep.subr.bf16.mxu0 %v185
    %249 = vmatpush1.bf16.msra.mxu0 %v184
    %250 = vmatprep.subr.bf16.mxu0 %v187
    %251 = vmatpush1.bf16.msra.mxu0 %v186
    %252 = vmatprep.subr.bf16.mxu0 %v189
    %253 = vmatpush1.bf16.msra.mxu0 %v188
    %254 = vmatprep.subr.bf16.mxu0 %v191
    %255 = vmatpush1.bf16.msra.mxu0 %v190
    %256 = vmatprep.subr.bf16.mxu0 %v193
    %257 = vmatpush1.bf16.msra.mxu0 %v192
    %258 = vmatprep.subr.bf16.mxu0 %v195
    %259 = vmatpush1.bf16.msra.mxu0 %v194
    %260 = vmatprep.subr.bf16.mxu0 %v197
    %261 = vmatpush1.bf16.msra.mxu0 %v196
    %262 = vmatprep.subr.bf16.mxu0 %v199
    %263 = vmatpush1.bf16.msra.mxu0 %v198
    %264 = vmatprep.subr.bf16.mxu0 %v201
    %265 = vmatpush1.bf16.msra.mxu0 %v200
    %266 = vmatprep.subr.bf16.mxu0 %v203
    %267 = vmatpush1.bf16.msra.mxu0 %v202
    %268 = vmatprep.subr.bf16.mxu0 %v205
    %269 = vmatpush1.bf16.msra.mxu0 %v204
    %270 = vmatprep.subr.bf16.mxu0 %v207
    %271 = vmatpush1.bf16.msra.mxu0 %v206
    %272 = vmatprep.subr.bf16.mxu0 %v209
    %273 = vmatpush1.bf16.msra.mxu0 %v208
    %274 = vmatprep.subr.bf16.mxu0 %v211
    %275 = vmatpush1.bf16.msra.mxu0 %v210
    %276 = vmatprep.mubr.bf16.mxu0 %v81
    %277 = vmatmul.mubr.bf16.gmra.mrb[0].mxu0 %v80
    %v278 = vpop.f32.mrb[0].mxu0
    %v279 = vadd.f32 %v67, %v278
    %v280 = vpop.f32.mrb[0].mxu0
    %v281 = vadd.f32 %v71, %v280
    %v282 = vpop.f32.mrb[0].mxu0
    %v283 = vadd.f32 %v67, %v282
    %v284 = vpop.f32.mrb[0].mxu0
    %v285 = vadd.f32 %v71, %v284
    %286 = vdwg.mxu0
    %v287 = vmax.f32 %v279, 0.0
    %v288 = vmax.f32 %v281, 0.0
    %v289 = vmax.f32 %v283, 0.0
    %v290 = vmax.f32 %v285, 0.0
    %v291 = vpack.c.bf16 %v289, %v287
    %v292 = vpack.c.bf16 %v290, %v288
    %v295 = vunpack.c.l.b16 %v291
    %v296 = vunpack.c.l.b16 %v292
    %v297 = vunpack.c.h.b16 %v291
    %v298 = vunpack.c.h.b16 %v292
    %v299 = vpack.c.b16 %v296, %v295
    %v300 = vpack.c.b16 %v298, %v297
    %303 = vst [vmem:[%s3] sm:$0xff] %v299
    %304 = vst [vmem:[%s3 + $0x8] sm:$0xff] %v300
    // Predicated region
    $region18: #{vgg_output_block.4} parent=1 // pred_check
      _
    $region19: #{vgg_output_block.4} parent=1 // pred_check_branch
      %306 = sbr.rel (0) target = $region21
    $region20: #{vgg_output_block.4} parent=1 // pred_region
      _
    $region21: #{vgg_output_block.4} parent=1 // pred_fallthru
      _
    // Predicated region
    $region22: #{vgg_output_block.4} parent=1 // pred_check
      _
    $region23: #{vgg_output_block.4} parent=1 // pred_check_branch
      %308 = sbr.rel (0) target = $region25
    $region24: #{vgg_output_block.4} parent=1 // pred_region
      _
    $region25: #{vgg_output_block.4} parent=1 // pred_fallthru
      _
    %309 = vsyncpa [#allocation3], 1

// kernel: vgg_output_block.5
$region0: #{vgg_output_block.5}
  #allocation0 [shape = 'u32[]', space=smem, size = 0x4, offset = 0x4, fixed_abs, tag = 'smem constant byte address 0x4 - core index']
  #allocation1 [shape = 'u32[144,128]{1,0:T(1,128)}', space=vmem, size = 0x12000, scoped, tag = 'internal scratch']
  %s0 = inlined_call_operand.vmem [shape: bf16[16,256], index: 0, kind: input, shape index: {}]
  %s1 = inlined_call_operand.vmem [shape: bf16[256,128], index: 1, kind: input, shape index: {}]
  %s2 = inlined_call_operand.vmem [shape: f32[1,128], index: 2, kind: input, shape index: {}]
  %s3 = inlined_call_operand.vmem [shape: f32[16,128], index: 3, kind: output, shape index: {}]
  %s4 = sld [smem:[#allocation0]]
  $region22: #{vgg_output_block.5} parent=0
    _
  %s6 = ssub.s32 1, %s4
  %s7 = scalar_select 0, %s6, %s4
  // Predicated region
  $region2: #{vgg_output_block.5} parent=0 // pred_check
    _
  $region3: #{vgg_output_block.5} parent=0 // pred_check_branch
    %9 = sbr.rel (0) target = $region5
  $region4: #{vgg_output_block.5} parent=0 // pred_region
    _
  $region5: #{vgg_output_block.5} parent=0 // pred_fallthru
    _
  // Predicated region
  $region6: #{vgg_output_block.5} parent=0 // pred_check
    _
  $region7: #{vgg_output_block.5} parent=0 // pred_check_branch
    %11 = sbr.rel (0) target = $region9
  $region8: #{vgg_output_block.5} parent=0 // pred_region
    _
  $region9: #{vgg_output_block.5} parent=0 // pred_fallthru
    _
  // Predicated region
  $region10: #{vgg_output_block.5} parent=0 // pred_check
    _
  $region11: #{vgg_output_block.5} parent=0 // pred_check_branch
    %13 = sbr.rel (0) target = $region13
  $region12: #{vgg_output_block.5} parent=0 // pred_region
    _
  $region13: #{vgg_output_block.5} parent=0 // pred_fallthru
    _
  %v15 = vld [vmem:[%s0] sm:$0xff]
  %v16 = vld [vmem:[%s0 + $0x8] sm:$0xff]
  %v17 = vld [vmem:[%s1] sm:$0xf]
  %v18 = vld [vmem:[%s1 + $0x4] sm:$0xf]
  %v19 = vld [vmem:[%s1 + $0x8] sm:$0xf]
  %v20 = vld [vmem:[%s1 + $0xc] sm:$0xf]
  %v21 = vld [vmem:[%s1 + $0x10] sm:$0xf]
  %v22 = vld [vmem:[%s1 + $0x14] sm:$0xf]
  %v23 = vld [vmem:[%s1 + $0x18] sm:$0xf]
  %v24 = vld [vmem:[%s1 + $0x1c] sm:$0xf]
  %v25 = vld [vmem:[%s1 + $0x20] sm:$0xf]
  %v26 = vld [vmem:[%s1 + $0x24] sm:$0xf]
  %v27 = vld [vmem:[%s1 + $0x28] sm:$0xf]
  %v28 = vld [vmem:[%s1 + $0x2c] sm:$0xf]
  %v29 = vld [vmem:[%s1 + $0x30] sm:$0xf]
  %v30 = vld [vmem:[%s1 + $0x34] sm:$0xf]
  %v31 = vld [vmem:[%s1 + $0x38] sm:$0xf]
  %v32 = vld [vmem:[%s1 + $0x3c] sm:$0xf]
  %v33 = vld [vmem:[%s1 + $0x40] sm:$0xf]
  %v34 = vld [vmem:[%s1 + $0x44] sm:$0xf]
  %v35 = vld [vmem:[%s1 + $0x48] sm:$0xf]
  %v36 = vld [vmem:[%s1 + $0x4c] sm:$0xf]
  %v37 = vld [vmem:[%s1 + $0x50] sm:$0xf]
  %v38 = vld [vmem:[%s1 + $0x54] sm:$0xf]
  %v39 = vld [vmem:[%s1 + $0x58] sm:$0xf]
  %v40 = vld [vmem:[%s1 + $0x5c] sm:$0xf]
  %v41 = vld [vmem:[%s1 + $0x60] sm:$0xf]
  %v42 = vld [vmem:[%s1 + $0x64] sm:$0xf]
  %v43 = vld [vmem:[%s1 + $0x68] sm:$0xf]
  %v44 = vld [vmem:[%s1 + $0x6c] sm:$0xf]
  %v45 = vld [vmem:[%s1 + $0x70] sm:$0xf]
  %v46 = vld [vmem:[%s1 + $0x74] sm:$0xf]
  %v47 = vld [vmem:[%s1 + $0x78] sm:$0xf]
  %v48 = vld [vmem:[%s1 + $0x7c] sm:$0xf]
  %v49 = vld [vmem:[%s2] sm:$0x1]
  %v51 = vlaneseq
  %v52 = vshrl.u32 %v51, 7
  %v53 = vsub.s32 0, %v52
  %v54 = vrot.slane %v49, %v53
  %v58 = vunpack.c.l.b16 %v15
  %v59 = vunpack.c.h.b16 %v15
  %v60 = vunpack.c.l.b16 %v16
  %v61 = vunpack.c.h.b16 %v16
  %v62 = vpack.c.b16 %v60, %v58
  %v63 = vpack.c.b16 %v61, %v59
  %v98 = vunpack.c.l.b16 %v17
  %v99 = vunpack.c.l.b16 %v18
  %v100 = vunpack.c.l.b16 %v19
  %v101 = vunpack.c.l.b16 %v20
  %v102 = vunpack.c.l.b16 %v21
  %v103 = vunpack.c.l.b16 %v22
  %v104 = vunpack.c.l.b16 %v23
  %v105 = vunpack.c.l.b16 %v24
  %v106 = vunpack.c.l.b16 %v25
  %v107 = vunpack.c.l.b16 %v26
  %v108 = vunpack.c.l.b16 %v27
  %v109 = vunpack.c.l.b16 %v28
  %v110 = vunpack.c.l.b16 %v29
  %v111 = vunpack.c.l.b16 %v30
  %v112 = vunpack.c.l.b16 %v31
  %v113 = vunpack.c.l.b16 %v32
  %v114 = vunpack.c.l.b16 %v33
  %v115 = vunpack.c.l.b16 %v34
  %v116 = vunpack.c.l.b16 %v35
  %v117 = vunpack.c.l.b16 %v36
  %v118 = vunpack.c.l.b16 %v37
  %v119 = vunpack.c.l.b16 %v38
  %v120 = vunpack.c.l.b16 %v39
  %v121 = vunpack.c.l.b16 %v40
  %v122 = vunpack.c.l.b16 %v41
  %v123 = vunpack.c.l.b16 %v42
  %v124 = vunpack.c.l.b16 %v43
  %v125 = vunpack.c.l.b16 %v44
  %v126 = vunpack.c.l.b16 %v45
  %v127 = vunpack.c.l.b16 %v46
  %v128 = vunpack.c.l.b16 %v47
  %v129 = vunpack.c.l.b16 %v48
  %v130 = vpack.c.b16 %v99, %v98
  %v131 = vpack.c.b16 %v101, %v100
  %v132 = vpack.c.b16 %v103, %v102
  %v133 = vpack.c.b16 %v105, %v104
  %v134 = vpack.c.b16 %v107, %v106
  %v135 = vpack.c.b16 %v109, %v108
  %v136 = vpack.c.b16 %v111, %v110
  %v137 = vpack.c.b16 %v113, %v112
  %v138 = vpack.c.b16 %v115, %v114
  %v139 = vpack.c.b16 %v117, %v116
  %v140 = vpack.c.b16 %v119, %v118
  %v141 = vpack.c.b16 %v121, %v120
  %v142 = vpack.c.b16 %v123, %v122
  %v143 = vpack.c.b16 %v125, %v124
  %v144 = vpack.c.b16 %v127, %v126
  %v145 = vpack.c.b16 %v129, %v128
  %162 = vmatprep.subr.bf16.mxu0 0
  %163 = vmatpush1.bf16.msra.mxu0 %v130
  %164 = vmatprep.subr.bf16.mxu0 0
  %165 = vmatpush1.bf16.msra.mxu0 %v131
  %166 = vmatprep.subr.bf16.mxu0 0
  %167 = vmatpush1.bf16.msra.mxu0 %v132
  %168 = vmatprep.subr.bf16.mxu0 0
  %169 = vmatpush1.bf16.msra.mxu0 %v133
  %170 = vmatprep.subr.bf16.mxu0 0
  %171 = vmatpush1.bf16.msra.mxu0 %v134
  %172 = vmatprep.subr.bf16.mxu0 0
  %173 = vmatpush1.bf16.msra.mxu0 %v135
  %174 = vmatprep.subr.bf16.mxu0 0
  %175 = vmatpush1.bf16.msra.mxu0 %v136
  %176 = vmatprep.subr.bf16.mxu0 0
  %177 = vmatpush1.bf16.msra.mxu0 %v137
  %178 = vmatprep.subr.bf16.mxu0 0
  %179 = vmatpush1.bf16.msra.mxu0 %v138
  %180 = vmatprep.subr.bf16.mxu0 0
  %181 = vmatpush1.bf16.msra.mxu0 %v139
  %182 = vmatprep.subr.bf16.mxu0 0
  %183 = vmatpush1.bf16.msra.mxu0 %v140
  %184 = vmatprep.subr.bf16.mxu0 0
  %185 = vmatpush1.bf16.msra.mxu0 %v141
  %186 = vmatprep.subr.bf16.mxu0 0
  %187 = vmatpush1.bf16.msra.mxu0 %v142
  %188 = vmatprep.subr.bf16.mxu0 0
  %189 = vmatpush1.bf16.msra.mxu0 %v143
  %190 = vmatprep.subr.bf16.mxu0 0
  %191 = vmatpush1.bf16.msra.mxu0 %v144
  %192 = vmatprep.subr.bf16.mxu0 0
  %193 = vmatpush1.bf16.msra.mxu0 %v145
  %194 = vmatprep.mubr.bf16.mxu0 %v63
  %195 = vmatmul.mubr.bf16.gmra.mrb[0].mxu0 %v62
  %v196 = vpop.f32.mrb[0].mxu0
  %v197 = vadd.f32 %v54, %v196
  %v198 = vpop.f32.mrb[0].mxu0
  %v199 = vpop.f32.mrb[0].mxu0
  %v200 = vadd.f32 %v54, %v199
  %v201 = vpop.f32.mrb[0].mxu0
  %202 = vdwg.mxu0
  %203 = vst [vmem:[%s3] sm:$0xff] %v197
  %204 = vst [vmem:[%s3 + $0x8] sm:$0xff] %v200
  // Predicated region
  $region14: #{vgg_output_block.5} parent=0 // pred_check
    _
  $region15: #{vgg_output_block.5} parent=0 // pred_check_branch
    %206 = sbr.rel (0) target = $region17
  $region16: #{vgg_output_block.5} parent=0 // pred_region
    _
  $region17: #{vgg_output_block.5} parent=0 // pred_fallthru
    _
  // Predicated region
  $region18: #{vgg_output_block.5} parent=0 // pred_check
    _
  $region19: #{vgg_output_block.5} parent=0 // pred_check_branch
    %208 = sbr.rel (0) target = $region21
  $region20: #{vgg_output_block.5} parent=0 // pred_region
    _
  $region21: #{vgg_output_block.5} parent=0 // pred_fallthru
    _

</llo_original>
